<compile_context>
chip_gen: v6e
topology: v6e:2x2x1
jax: 0.10.0
libtpu: 0.0.40
codegen_flags: <defaults>
</compile_context>

<pallas_src>
import functools

import jax
import jax.numpy as jnp
from jax.experimental import pallas as pl
from jax.experimental.pallas import tpu as pltpu


def mlp_kernel(p_ref, x_ref, o_ref):
    # p_ref: (17,) f32 in SMEM:
    #   p[0:4]   = w1[0, :]   (fc1.weight.T row 0)
    #   p[4:8]   = w1[1, :]   (fc1.weight.T row 1)
    #   p[8:12]  = b1
    #   p[12:16] = w2[:, 0]   (fc2.weight.T)
    #   p[16]    = b2
    # x_ref: (2, tile_r, 128) f32 in VMEM -- feature-major, fully dense vregs.
    # o_ref: (tile_r, 128) f32 in VMEM -- fully dense output vregs.
    x0 = x_ref[0]                                   # (tile_r, 128)
    x1 = x_ref[1]                                   # (tile_r, 128)

    # Unrolled over the 4 hidden units: pure VPU broadcast mul/add + relu.
    h = jnp.maximum(x0 * p_ref[0] + (x1 * p_ref[4] + p_ref[8]), 0.0)
    acc = h * p_ref[12]
    for j in range(1, 4):
        h = jnp.maximum(x0 * p_ref[j] + (x1 * p_ref[4 + j] + p_ref[8 + j]), 0.0)
        acc = acc + h * p_ref[12 + j]

    o_ref[...] = (acc + p_ref[16]).astype(o_ref.dtype)


def _forward_feature_major(xt, params, *, tile_r):
    """xt: (2, R, 128) f32 feature-major activations (R % tile_r == 0).
    params: (17,) f32 flat parameter table.  Returns (R, 128) f32."""
    r_total = xt.shape[1]
    grid = (r_total // tile_r,)
    return pl.pallas_call(
        mlp_kernel,
        out_shape=jax.ShapeDtypeStruct((r_total, 128), jnp.float32),
        grid=grid,
        in_specs=[
            pl.BlockSpec(memory_space=pltpu.MemorySpace.SMEM),      # params, resident
            pl.BlockSpec((2, tile_r, 128), lambda i: (0, i, 0)),     # x tile, dense
        ],
        out_specs=pl.BlockSpec((tile_r, 128), lambda i: (i, 0)),     # out tile, dense
        compiler_params=pltpu.CompilerParams(
            dimension_semantics=("parallel",),                       # megacore split on v7x
            vmem_limit_bytes=32 * 1024 * 1024,                       # ~6 MiB actually used
        ),
    )(params, xt)


@functools.partial(jax.jit, static_argnames=("tile_r",))
def simple_nn_forward(x, w1, b1, w2, b2, *, tile_r=2048):
    """PyTorch-facing entry point.
    x: (N, 2) f32; w1: (2,4)=fc1.weight.T; b1: (4,); w2: (4,1)=fc2.weight.T; b2: (1,).
    Returns (N, 1) f32 = relu(x @ w1 + b1) @ w2 + b2."""
    n = x.shape[0]

    # Row tiling: 128 samples per row, tile_r rows (multiple of 8) per grid step.
    rows_needed = pl.cdiv(n, 128)
    tile_r = max(8, min(tile_r, ((rows_needed + 7) // 8) * 8))
    r_total = pl.cdiv(rows_needed, tile_r) * tile_r
    n_pad = r_total * 128

    # Flatten all 17 parameters into one SMEM scalar table.
    params = jnp.concatenate(
        [w1.reshape(-1), b1.reshape(-1), w2.reshape(-1), b2.reshape(-1)]
    ).astype(jnp.float32)

    # Single fused pad + transpose + reshape to the feature-major kernel layout.
    # (In a feature-major pipeline, skip this and call _forward_feature_major directly.)
    xp = x.astype(jnp.float32)
    if n_pad != n:
        xp = jnp.pad(xp, ((0, n_pad - n), (0, 0)))
    xt = xp.T.reshape(2, r_total, 128)

    out = _forward_feature_major(xt, params, tile_r=tile_r)          # (r_total, 128)

    # out[r, l] is the prediction for sample r*128 + l; padded samples are dropped.
    return out.reshape(n_pad)[:n].reshape(n, 1)


def init_params(key):
    # Deterministic init mimicking nn.Linear's U(-1/sqrt(fan_in), 1/sqrt(fan_in)).
    k1, k2, k3, k4 = jax.random.split(key, 4)
    lim1 = 1.0 / jnp.sqrt(2.0)
    lim2 = 1.0 / jnp.sqrt(4.0)
    w1 = jax.random.uniform(k1, (2, 4), jnp.float32, -lim1, lim1)   # fc1.weight.T
    b1 = jax.random.uniform(k2, (4,), jnp.float32, -lim1, lim1)     # fc1.bias
    w2 = jax.random.uniform(k3, (4, 1), jnp.float32, -lim2, lim2)   # fc2.weight.T
    b2 = jax.random.uniform(k4, (1,), jnp.float32, -lim2, lim2)     # fc2.bias
    return w1, b1, w2, b2


if __name__ == "__main__":
    key = jax.random.PRNGKey(0)
    kx, kp = jax.random.split(key)
    n = 8
    x = jax.random.normal(kx, (n, 2), jnp.float32)   # batch=8, in_features=2
    w1, b1, w2, b2 = init_params(kp)

    out = simple_nn_forward(x, w1, b1, w2, b2)
    jax.block_until_ready(out)

    # Pure-JAX reference of the PyTorch forward: relu(x@W1+b1)@W2+b2.
    ref = jnp.maximum(x @ w1 + b1[None, :], 0.0) @ w2 + b2[None, :]
    assert out.shape == (n, 1)
    assert jnp.allclose(out, ref, atol=1e-5, rtol=1e-5), "mismatch vs reference"
    print("KERNEL_OK")
</pallas_src>

<mosaic_0001>
module attributes {stable_mosaic.version = 11 : i64} {
  func.func @mlp_kernel(%arg0: i32, %arg1: memref<17xf32, #tpu.memory_space<smem>>, %arg2: memref<2x8x128xf32, #tpu.memory_space<vmem>>, %arg3: memref<8x128xf32, #tpu.memory_space<vmem>>) attributes {dimension_semantics = [#tpu.dimension_semantics<parallel>], iteration_bounds = array<i64: 1>, scalar_prefetch = 0 : i64, scratch_operands = 0 : i64, tpu.core_type = #tpu.core_type<tc>, window_params = [{transform_indices = @transform_0, window_bounds = array<i64: 17>}, {transform_indices = @transform_1, window_bounds = array<i64: 2, 8, 128>}, {transform_indices = @transform_2, window_bounds = array<i64: 8, 128>}]} {
    %c0 = arith.constant 0 : index
    %c0_0 = arith.constant 0 : index
    %c0_1 = arith.constant 0 : index
    %0 = vector.load %arg2[%c0, %c0_0, %c0_1] : memref<2x8x128xf32, #tpu.memory_space<vmem>>, vector<1x8x128xf32>
    %1 = vector.shape_cast %0 : vector<1x8x128xf32> to vector<8x128xf32>
    %c1 = arith.constant 1 : index
    %c0_2 = arith.constant 0 : index
    %c0_3 = arith.constant 0 : index
    %2 = vector.load %arg2[%c1, %c0_2, %c0_3] : memref<2x8x128xf32, #tpu.memory_space<vmem>>, vector<1x8x128xf32>
    %3 = vector.shape_cast %2 : vector<1x8x128xf32> to vector<8x128xf32>
    %c0_4 = arith.constant 0 : index
    %4 = memref.load %arg1[%c0_4] : memref<17xf32, #tpu.memory_space<smem>>
    %5 = vector.broadcast %4 : f32 to vector<8x128xf32>
    %6 = arith.mulf %1, %5 : vector<8x128xf32>
    %c4 = arith.constant 4 : index
    %7 = memref.load %arg1[%c4] : memref<17xf32, #tpu.memory_space<smem>>
    %8 = vector.broadcast %7 : f32 to vector<8x128xf32>
    %9 = arith.mulf %3, %8 : vector<8x128xf32>
    %c8 = arith.constant 8 : index
    %10 = memref.load %arg1[%c8] : memref<17xf32, #tpu.memory_space<smem>>
    %11 = vector.broadcast %10 : f32 to vector<8x128xf32>
    %12 = arith.addf %9, %11 : vector<8x128xf32>
    %13 = arith.addf %6, %12 : vector<8x128xf32>
    %cst = arith.constant 0.000000e+00 : f32
    %14 = vector.broadcast %cst : f32 to vector<8x128xf32>
    %15 = arith.maximumf %13, %14 : vector<8x128xf32>
    %c12 = arith.constant 12 : index
    %16 = memref.load %arg1[%c12] : memref<17xf32, #tpu.memory_space<smem>>
    %17 = vector.broadcast %16 : f32 to vector<8x128xf32>
    %18 = arith.mulf %15, %17 : vector<8x128xf32>
    %c1_5 = arith.constant 1 : index
    %19 = memref.load %arg1[%c1_5] : memref<17xf32, #tpu.memory_space<smem>>
    %20 = vector.broadcast %19 : f32 to vector<8x128xf32>
    %21 = arith.mulf %1, %20 : vector<8x128xf32>
    %c5 = arith.constant 5 : index
    %22 = memref.load %arg1[%c5] : memref<17xf32, #tpu.memory_space<smem>>
    %23 = vector.broadcast %22 : f32 to vector<8x128xf32>
    %24 = arith.mulf %3, %23 : vector<8x128xf32>
    %c9 = arith.constant 9 : index
    %25 = memref.load %arg1[%c9] : memref<17xf32, #tpu.memory_space<smem>>
    %26 = vector.broadcast %25 : f32 to vector<8x128xf32>
    %27 = arith.addf %24, %26 : vector<8x128xf32>
    %28 = arith.addf %21, %27 : vector<8x128xf32>
    %cst_6 = arith.constant 0.000000e+00 : f32
    %29 = vector.broadcast %cst_6 : f32 to vector<8x128xf32>
    %30 = arith.maximumf %28, %29 : vector<8x128xf32>
    %c13 = arith.constant 13 : index
    %31 = memref.load %arg1[%c13] : memref<17xf32, #tpu.memory_space<smem>>
    %32 = vector.broadcast %31 : f32 to vector<8x128xf32>
    %33 = arith.mulf %30, %32 : vector<8x128xf32>
    %34 = arith.addf %18, %33 : vector<8x128xf32>
    %c2 = arith.constant 2 : index
    %35 = memref.load %arg1[%c2] : memref<17xf32, #tpu.memory_space<smem>>
    %36 = vector.broadcast %35 : f32 to vector<8x128xf32>
    %37 = arith.mulf %1, %36 : vector<8x128xf32>
    %c6 = arith.constant 6 : index
    %38 = memref.load %arg1[%c6] : memref<17xf32, #tpu.memory_space<smem>>
    %39 = vector.broadcast %38 : f32 to vector<8x128xf32>
    %40 = arith.mulf %3, %39 : vector<8x128xf32>
    %c10 = arith.constant 10 : index
    %41 = memref.load %arg1[%c10] : memref<17xf32, #tpu.memory_space<smem>>
    %42 = vector.broadcast %41 : f32 to vector<8x128xf32>
    %43 = arith.addf %40, %42 : vector<8x128xf32>
    %44 = arith.addf %37, %43 : vector<8x128xf32>
    %cst_7 = arith.constant 0.000000e+00 : f32
    %45 = vector.broadcast %cst_7 : f32 to vector<8x128xf32>
    %46 = arith.maximumf %44, %45 : vector<8x128xf32>
    %c14 = arith.constant 14 : index
    %47 = memref.load %arg1[%c14] : memref<17xf32, #tpu.memory_space<smem>>
    %48 = vector.broadcast %47 : f32 to vector<8x128xf32>
    %49 = arith.mulf %46, %48 : vector<8x128xf32>
    %50 = arith.addf %34, %49 : vector<8x128xf32>
    %c3 = arith.constant 3 : index
    %51 = memref.load %arg1[%c3] : memref<17xf32, #tpu.memory_space<smem>>
    %52 = vector.broadcast %51 : f32 to vector<8x128xf32>
    %53 = arith.mulf %1, %52 : vector<8x128xf32>
    %c7 = arith.constant 7 : index
    %54 = memref.load %arg1[%c7] : memref<17xf32, #tpu.memory_space<smem>>
    %55 = vector.broadcast %54 : f32 to vector<8x128xf32>
    %56 = arith.mulf %3, %55 : vector<8x128xf32>
    %c11 = arith.constant 11 : index
    %57 = memref.load %arg1[%c11] : memref<17xf32, #tpu.memory_space<smem>>
    %58 = vector.broadcast %57 : f32 to vector<8x128xf32>
    %59 = arith.addf %56, %58 : vector<8x128xf32>
    %60 = arith.addf %53, %59 : vector<8x128xf32>
    %cst_8 = arith.constant 0.000000e+00 : f32
    %61 = vector.broadcast %cst_8 : f32 to vector<8x128xf32>
    %62 = arith.maximumf %60, %61 : vector<8x128xf32>
    %c15 = arith.constant 15 : index
    %63 = memref.load %arg1[%c15] : memref<17xf32, #tpu.memory_space<smem>>
    %64 = vector.broadcast %63 : f32 to vector<8x128xf32>
    %65 = arith.mulf %62, %64 : vector<8x128xf32>
    %66 = arith.addf %50, %65 : vector<8x128xf32>
    %c16 = arith.constant 16 : index
    %67 = memref.load %arg1[%c16] : memref<17xf32, #tpu.memory_space<smem>>
    %68 = vector.broadcast %67 : f32 to vector<8x128xf32>
    %69 = arith.addf %66, %68 : vector<8x128xf32>
    %c0_9 = arith.constant 0 : index
    %c0_10 = arith.constant 0 : index
    %70 = vector.load %arg3[%c0_9, %c0_10] : memref<8x128xf32, #tpu.memory_space<vmem>>, vector<8x128xf32>
    tpu.vector_store %arg3[%c0_9, %c0_10], %69 {strides = array<i32>} : memref<8x128xf32, #tpu.memory_space<vmem>>, vector<8x128xf32>,
    return
  }
  func.func @transform_0(%arg0: i32) -> i32 {
    %c0_i32 = arith.constant 0 : i32
    %c0_i32_0 = arith.constant 0 : i32
    return %c0_i32 : i32
  }
  func.func @transform_1(%arg0: i32) -> (i32, i32, i32) {
    %c0_i32 = arith.constant 0 : i32
    %c0_i32_0 = arith.constant 0 : i32
    %c0_i32_1 = arith.constant 0 : i32
    return %c0_i32, %arg0, %c0_i32_0 : i32, i32, i32
  }
  func.func @transform_2(%arg0: i32) -> (i32, i32) {
    %c0_i32 = arith.constant 0 : i32
    %c0_i32_0 = arith.constant 0 : i32
    return %arg0, %c0_i32 : i32, i32
  }
}

</mosaic_0001>

<llo_original>
// kernel: simple_nn_forward.1
$region0: #{simple_nn_forward.1}
  #allocation0 [shape = 'u32[]', space=smem, size = 0x4, offset = 0x4, fixed_abs, tag = 'smem constant byte address 0x4 - core index']
  #allocation1 [shape = 'u32[144,128]{1,0:T(1,128)}', space=vmem, size = 0x12000, scoped, tag = 'internal scratch']
  %s0 = inlined_call_operand.vmem [shape: f32[17], index: 0, kind: input, shape index: {}]
  %s1 = inlined_call_operand.vmem [shape: f32[2,8,128], index: 1, kind: input, shape index: {}]
  %s2 = inlined_call_operand.vmem [shape: f32[8,128], index: 2, kind: output, shape index: {}]
  %s3 = sld [smem:[#allocation0]]
  $region22: #{simple_nn_forward.1} parent=0
    _
  %s5 = ssub.s32 1, %s3
  %s6 = scalar_select 0, %s5, %s3
  $region1: #{simple_nn_forward.1} parent=0
    #allocation2 [shape = 'u8[512]{0}', space=smem, size = 0x200, scoped, tag = 'input window, operand 0, single buffered']
    #allocation3 [shape = 's32[1]{0}', space=sflag, size = 0x4, scoped, tag = 'scoped memory for simple_nn_forward.1']
    %7 = vsyncpa [#allocation3], 0
    // Predicated region
    $region2: #{simple_nn_forward.1} parent=1 // pred_check
      _
    $region3: #{simple_nn_forward.1} parent=1 // pred_check_branch
      %9 = sbr.rel (0) target = $region5
    $region4: #{simple_nn_forward.1} parent=1 // pred_region
      %s11 = ssub.s32 16, 16
      %12 = vsyncadd [#allocation3], %s11
      %s14 = sshll.u32 %s0, 4
      %s15 = int_to_ptr.vmem [resolvable:$true] %s14
      %17 = dma.vmem_to_smem %s15, 16, [#allocation2], [#allocation3]
    $region5: #{simple_nn_forward.1} parent=1 // pred_fallthru
      _
    // Predicated region
    $region6: #{simple_nn_forward.1} parent=1 // pred_check
      _
    $region7: #{simple_nn_forward.1} parent=1 // pred_check_branch
      %19 = sbr.rel (0) target = $region9
    $region8: #{simple_nn_forward.1} parent=1 // pred_region
      _
    $region9: #{simple_nn_forward.1} parent=1 // pred_fallthru
      _
    // Predicated region
    $region10: #{simple_nn_forward.1} parent=1 // pred_check
      _
    $region11: #{simple_nn_forward.1} parent=1 // pred_check_branch
      %21 = sbr.rel (0) target = $region13
    $region12: #{simple_nn_forward.1} parent=1 // pred_region
      %22 = dma.done [#allocation3], 16
    $region13: #{simple_nn_forward.1} parent=1 // pred_fallthru
      _
    %23 = sfence
    %v24 = vld [vmem:[%s1] sm:$0xff]
    %s25 = scalar_lea.vmem %s1, 8
    %v26 = vld [vmem:[%s25] sm:$0xff]
    %s27 = sld [smem:[#allocation2]]
    %v28 = vstv %s27
    %v29 = vmul.f32 %v24, %v28
    %s30 = sld [smem:[#allocation2 + $0x4]]
    %v31 = vstv %s30
    %v32 = vmul.f32 %v26, %v31
    %s33 = sld [smem:[#allocation2 + $0x8]]
    %v34 = vstv %s33
    %v35 = vadd.f32 %v32, %v34
    %v36 = vadd.f32 %v29, %v35
    %v37 = vmax.f32 %v36, 0.0
    %s38 = sld [smem:[#allocation2 + $0xc]]
    %v39 = vstv %s38
    %v40 = vmul.f32 %v37, %v39
    %s41 = sld [smem:[#allocation2 + $0x1]]
    %v42 = vstv %s41
    %v43 = vmul.f32 %v24, %v42
    %s44 = sld [smem:[#allocation2 + $0x5]]
    %v45 = vstv %s44
    %v46 = vmul.f32 %v26, %v45
    %s47 = sld [smem:[#allocation2 + $0x9]]
    %v48 = vstv %s47
    %v49 = vadd.f32 %v46, %v48
    %v50 = vadd.f32 %v43, %v49
    %v51 = vmax.f32 %v50, 0.0
    %s52 = sld [smem:[#allocation2 + $0xd]]
    %v53 = vstv %s52
    %v54 = vmul.f32 %v51, %v53
    %v55 = vadd.f32 %v40, %v54
    %s56 = sld [smem:[#allocation2 + $0x2]]
    %v57 = vstv %s56
    %v58 = vmul.f32 %v24, %v57
    %s59 = sld [smem:[#allocation2 + $0x6]]
    %v60 = vstv %s59
    %v61 = vmul.f32 %v26, %v60
    %s62 = sld [smem:[#allocation2 + $0xa]]
    %v63 = vstv %s62
    %v64 = vadd.f32 %v61, %v63
    %v65 = vadd.f32 %v58, %v64
    %v66 = vmax.f32 %v65, 0.0
    %s67 = sld [smem:[#allocation2 + $0xe]]
    %v68 = vstv %s67
    %v69 = vmul.f32 %v66, %v68
    %v70 = vadd.f32 %v55, %v69
    %s71 = sld [smem:[#allocation2 + $0x3]]
    %v72 = vstv %s71
    %v73 = vmul.f32 %v24, %v72
    %s74 = sld [smem:[#allocation2 + $0x7]]
    %v75 = vstv %s74
    %v76 = vmul.f32 %v26, %v75
    %s77 = sld [smem:[#allocation2 + $0xb]]
    %v78 = vstv %s77
    %v79 = vadd.f32 %v76, %v78
    %v80 = vadd.f32 %v73, %v79
    %v81 = vmax.f32 %v80, 0.0
    %s82 = sld [smem:[#allocation2 + $0xf]]
    %v83 = vstv %s82
    %v84 = vmul.f32 %v81, %v83
    %v85 = vadd.f32 %v70, %v84
    %s86 = sld [smem:[#allocation2 + $0x10]]
    %v87 = vstv %s86
    %v88 = vadd.f32 %v85, %v87
    %89 = vst [vmem:[%s2] sm:$0xff] %v88
    // Predicated region
    $region14: #{simple_nn_forward.1} parent=1 // pred_check
      _
    $region15: #{simple_nn_forward.1} parent=1 // pred_check_branch
      %91 = sbr.rel (0) target = $region17
    $region16: #{simple_nn_forward.1} parent=1 // pred_region
      _
    $region17: #{simple_nn_forward.1} parent=1 // pred_fallthru
      _
    // Predicated region
    $region18: #{simple_nn_forward.1} parent=1 // pred_check
      _
    $region19: #{simple_nn_forward.1} parent=1 // pred_check_branch
      %93 = sbr.rel (0) target = $region21
    $region20: #{simple_nn_forward.1} parent=1 // pred_region
      _
    $region21: #{simple_nn_forward.1} parent=1 // pred_fallthru
      _
    %94 = vsyncpa [#allocation3], 1

</llo_original>
